<compile_context>
chip_gen: v5e
topology: v5e:2x2
jax: 0.10.0
libtpu: 0.0.40
codegen_flags: <defaults>
</compile_context>

<pallas_src>
import functools
import jax
import jax.numpy as jnp
from jax.experimental import pallas as pl
from jax.experimental.pallas import tpu as pltpu


def _round_up(n, m):
    return ((n + m - 1) // m) * m


# --------------------------------------------------------------------------- #
# Kernel
# --------------------------------------------------------------------------- #
def _e2e_kernel(use_relu, use_sigmoid,
                x_ref, w1_ref, b1_ref, w2_ref, b2_ref, w3_ref, b3_ref,
                concepts_ref, final_ref):
    x = x_ref[...]                                                  # (TILE_B, D_in) bf16

    # ---- first_model: shared backbone + ReLU + concatenated concept heads ----
    h = jnp.dot(x, w1_ref[...], preferred_element_type=jnp.float32) + b1_ref[...]
    h = jnp.maximum(h, 0.0).astype(jnp.bfloat16)                    # narrow hidden early

    concepts = (jnp.dot(h, w2_ref[...], preferred_element_type=jnp.float32)
                + b2_ref[...])                                      # (TILE_B, AC) f32
    concepts_ref[...] = concepts                                    # pre-activation logits, unpadded store

    # ---- forward_stage2: activation applies only to the stage-2 (sec_model) inputs ----
    if use_relu:
        act = jnp.maximum(concepts, 0.0)
    elif use_sigmoid:
        # exp (EUP) + approx reciprocal (EUP slot) instead of a precise VPU divide chain
        act = pl.reciprocal(1.0 + jnp.exp(-concepts), approx=True)
    else:
        act = concepts

    # ---- sec_model: narrow (AC -> Y) matmul; a single masked MXU pass at these sizes.
    # TODO(synk): if AC/Y ever grow to >=128 this stays the right MXU path; for 8x3 a
    # VPU broadcast-reduce would also work, but the narrow dot lowers cleanly already.
    final_ref[...] = (jnp.dot(act.astype(w3_ref.dtype), w3_ref[...],
                              preferred_element_type=jnp.float32) + b3_ref[...])


# --------------------------------------------------------------------------- #
# Wrapper helpers
# --------------------------------------------------------------------------- #
def prepare_params(params):
    """One-time parameter prep (hoisted out of the per-call path):
    cast MXU operands to bf16, make biases f32 row vectors."""
    w1, b1, w2, b2, w3, b3 = params
    return (w1.astype(jnp.bfloat16),
            jnp.asarray(b1, jnp.float32).reshape(1, -1),
            w2.astype(jnp.bfloat16),
            jnp.asarray(b2, jnp.float32).reshape(1, -1),
            w3.astype(jnp.bfloat16),
            jnp.asarray(b3, jnp.float32).reshape(1, -1))


def _vmem_limit_bytes():
    cap = None
    try:
        cap = getattr(pltpu.get_tpu_info(), "vmem_capacity_bytes", None)
    except Exception:
        cap = None
    if not cap:
        cap = 64 * 1024 * 1024                       # conservative default (v7x per-core VMEM)
    return int(min(96 * 1024 * 1024, (cap * 3) // 4))  # 48 MiB on v7x, 96 MiB on v5e/v6e


def _pick_batch_tiling(B, tile_b_cap, min_steps=2):
    """16-row-aligned batch tiles; >=2 grid steps whenever every step still gets >=32
    real rows (keeps both v7x TensorCores busy + restores pipelining) while keeping
    the batch pad small (no near-2x padding)."""
    B16 = _round_up(max(B, 1), 16)
    steps = max(pl.cdiv(B16, tile_b_cap), min(min_steps, max(B16 // 32, 1)))
    tile = _round_up(pl.cdiv(B16, steps), 16)
    return tile, tile * steps, steps


# --------------------------------------------------------------------------- #
# Forward
# --------------------------------------------------------------------------- #
def end2end_forward(x, params, n_attributes, n_class_attr,
                    use_relu=False, use_sigmoid=True, tile_b=1024):
    """Returns (final_logits [B, n_classes], concept_logits [B, A*C])."""
    if params[0].dtype != jnp.bfloat16:
        params = prepare_params(params)              # cast once if caller didn't pre-prep
    w1, b1, w2, b2, w3, b3 = params

    B, D_in = x.shape
    H = w1.shape[1]
    AC = n_attributes * n_class_attr
    Y = w3.shape[1]
    assert w2.shape == (H, AC) and w3.shape == (AC, Y)

    TILE_B, B_pad, steps = _pick_batch_tiling(B, tile_b)
    xb = x.astype(jnp.bfloat16)
    if B_pad != B:
        xb = jnp.pad(xb, ((0, B_pad - B), (0, 0)))
    grid = (steps,)

    flops = 2 * B_pad * (D_in * H + H * AC + AC * Y)
    bytes_accessed = (xb.size * 2 + (w1.size + w2.size + w3.size) * 2
                      + (b1.size + b2.size + b3.size) * 4
                      + B_pad * (AC + Y) * 4)
    cost = pl.CostEstimate(flops=flops,
                           transcendentals=B_pad * AC if use_sigmoid else 0,
                           bytes_accessed=bytes_accessed)

    kernel = functools.partial(_e2e_kernel, use_relu, use_sigmoid)

    def run(single_buffer_weights):
        def resident(shape):
            idx = lambda i: (0, 0)
            if single_buffer_weights:
                # grid-invariant blocks: no need to double-buffer constants
                return pl.BlockSpec(shape, idx, pipeline_mode=pl.Buffered(1))
            return pl.BlockSpec(shape, idx)

        return pl.pallas_call(
            kernel,
            out_shape=(jax.ShapeDtypeStruct((B_pad, AC), jnp.float32),
                       jax.ShapeDtypeStruct((B_pad, Y), jnp.float32)),
            grid=grid,
            in_specs=[
                pl.BlockSpec((TILE_B, D_in), lambda i: (i, 0)),   # x: batch-tiled
                resident((D_in, H)),                              # W1  (VMEM-resident)
                resident((1, H)),                                 # b1
                resident((H, AC)),                                # W2 (concept heads)
                resident((1, AC)),                                # b2
                resident((AC, Y)),                                # W3 (sec_model)
                resident((1, Y)),                                 # b3
            ],
            out_specs=(pl.BlockSpec((TILE_B, AC), lambda i: (i, 0)),
                       pl.BlockSpec((TILE_B, Y), lambda i: (i, 0))),
            compiler_params=pltpu.CompilerParams(
                dimension_semantics=("parallel",),                # megacore sharding on v7x
                vmem_limit_bytes=_vmem_limit_bytes()),
            cost_estimate=cost,
        )(xb, w1, b1, w2, b2, w3, b3)

    try:
        concepts_p, final_p = run(True)
    except Exception:
        # pl.Buffered(1) rejected by this jax build -> fall back to default double-buffering
        concepts_p, final_p = run(False)

    return final_p[:B, :], concepts_p[:B, :]


def end2end_all_out(x, params, n_attributes, n_class_attr,
                    use_relu=False, use_sigmoid=True):
    """PyTorch-compatible output: [sec_model(stage2_inputs), *stage1_out]."""
    final, concepts = end2end_forward(x, params, n_attributes, n_class_attr,
                                      use_relu=use_relu, use_sigmoid=use_sigmoid)
    stage1 = concepts.reshape(x.shape[0], n_attributes, n_class_attr)
    return [final] + [stage1[:, a, :] for a in range(n_attributes)]


# --------------------------------------------------------------------------- #
# Pure-JAX reference with the same bf16-in / f32-accumulate numerics
# --------------------------------------------------------------------------- #
def _reference_bf16(x, params, use_relu, use_sigmoid):
    w1, b1, w2, b2, w3, b3 = params
    bf, f32 = jnp.bfloat16, jnp.float32
    h = jnp.dot(x.astype(bf), w1.astype(bf), preferred_element_type=f32) + b1
    h = jnp.maximum(h, 0.0)
    concepts = jnp.dot(h.astype(bf), w2.astype(bf), preferred_element_type=f32) + b2
    if use_relu:
        act = jnp.maximum(concepts, 0.0)
    elif use_sigmoid:
        act = jax.nn.sigmoid(concepts)
    else:
        act = concepts
    final = jnp.dot(act.astype(bf), w3.astype(bf), preferred_element_type=f32) + b3
    return concepts, final


if __name__ == "__main__":
    B, D_in, H = 8, 32, 32            # batch, input features, hidden
    n_attributes, n_class_attr = 4, 2
    n_classes = 3
    AC = n_attributes * n_class_attr

    key = jax.random.PRNGKey(0)
    kx, k1, k2, k3, k4, k5, k6 = jax.random.split(key, 7)
    x = jax.random.normal(kx, (B, D_in), dtype=jnp.float32)

    raw_params = (
        jax.random.normal(k1, (D_in, H), dtype=jnp.float32) * 0.1,        # first_model W1
        jax.random.normal(k2, (1, H), dtype=jnp.float32) * 0.1,           # first_model b1
        jax.random.normal(k3, (H, AC), dtype=jnp.float32) * 0.1,          # concept heads W2
        jax.random.normal(k4, (1, AC), dtype=jnp.float32) * 0.1,          # concept heads b2
        jax.random.normal(k5, (AC, n_classes), dtype=jnp.float32) * 0.1,  # sec_model W3
        jax.random.normal(k6, (1, n_classes), dtype=jnp.float32) * 0.1,   # sec_model b3
    )

    # one-time parameter prep (hoisted out of the per-call path)
    params = prepare_params(raw_params)

    all_out = end2end_all_out(x, params, n_attributes, n_class_attr,
                              use_relu=False, use_sigmoid=True)
    jax.block_until_ready(all_out)

    # shape checks against the module contract
    assert all_out[0].shape == (B, n_classes)
    assert len(all_out) == 1 + n_attributes
    for o in all_out[1:]:
        assert o.shape == (B, n_class_attr)

    # numeric checks against a pure-JAX reference with matching bf16/f32 numerics
    # (approx-EUP sigmoid + bf16 casts -> loose-ish tolerance)
    ref_concepts, ref_final = _reference_bf16(x, raw_params, False, True)
    got_concepts = jnp.concatenate(all_out[1:], axis=1)
    assert jnp.allclose(all_out[0], ref_final, atol=1e-2, rtol=1e-2)
    assert jnp.allclose(got_concepts, ref_concepts, atol=1e-2, rtol=1e-2)

    print("KERNEL_OK")
</pallas_src>

<mosaic_0001>
module attributes {stable_mosaic.version = 11 : i64} {
  func.func @_e2e_kernel(%arg0: i32, %arg1: memref<16x32xbf16, #tpu.memory_space<vmem>>, %arg2: memref<32x32xbf16, #tpu.memory_space<vmem>>, %arg3: memref<1x32xf32, #tpu.memory_space<vmem>>, %arg4: memref<32x8xbf16, #tpu.memory_space<vmem>>, %arg5: memref<1x8xf32, #tpu.memory_space<vmem>>, %arg6: memref<8x3xbf16, #tpu.memory_space<vmem>>, %arg7: memref<1x3xf32, #tpu.memory_space<vmem>>, %arg8: memref<16x8xf32, #tpu.memory_space<vmem>>, %arg9: memref<16x3xf32, #tpu.memory_space<vmem>>) attributes {dimension_semantics = [#tpu.dimension_semantics<parallel>], iteration_bounds = array<i64: 1>, scalar_prefetch = 0 : i64, scratch_operands = 0 : i64, tpu.core_type = #tpu.core_type<tc>, window_params = [{transform_indices = @transform_0, window_bounds = array<i64: 16, 32>}, {pipeline_mode = #tpu.pipeline_mode<synchronous>, transform_indices = @transform_1, window_bounds = array<i64: 32, 32>}, {pipeline_mode = #tpu.pipeline_mode<synchronous>, transform_indices = @transform_2, window_bounds = array<i64: 1, 32>}, {pipeline_mode = #tpu.pipeline_mode<synchronous>, transform_indices = @transform_3, window_bounds = array<i64: 32, 8>}, {pipeline_mode = #tpu.pipeline_mode<synchronous>, transform_indices = @transform_4, window_bounds = array<i64: 1, 8>}, {pipeline_mode = #tpu.pipeline_mode<synchronous>, transform_indices = @transform_5, window_bounds = array<i64: 8, 3>}, {pipeline_mode = #tpu.pipeline_mode<synchronous>, transform_indices = @transform_6, window_bounds = array<i64: 1, 3>}, {transform_indices = @transform_7, window_bounds = array<i64: 16, 8>}, {transform_indices = @transform_8, window_bounds = array<i64: 16, 3>}]} {
    %c0 = arith.constant 0 : index
    %c0_0 = arith.constant 0 : index
    %0 = vector.load %arg1[%c0, %c0_0] : memref<16x32xbf16, #tpu.memory_space<vmem>>, vector<16x32xbf16>
    %c0_1 = arith.constant 0 : index
    %c0_2 = arith.constant 0 : index
    %1 = vector.load %arg2[%c0_1, %c0_2] : memref<32x32xbf16, #tpu.memory_space<vmem>>, vector<32x32xbf16>
    %cst = arith.constant dense<0.000000e+00> : vector<16x32xf32>
    %2 = tpu.matmul %0, %1, %cst {dimension_numbers = #tpu.dot_dimension_numbers<[1], [0], [0], [1], [0, 0, 1, 1], [], []>} : vector<16x32xbf16>, vector<32x32xbf16>, vector<16x32xf32> -> vector<16x32xf32>
    %c0_3 = arith.constant 0 : index
    %c0_4 = arith.constant 0 : index
    %3 = vector.load %arg3[%c0_3, %c0_4] : memref<1x32xf32, #tpu.memory_space<vmem>>, vector<1x32xf32>
    %4 = vector.broadcast %3 : vector<1x32xf32> to vector<16x32xf32>
    %5 = arith.addf %2, %4 : vector<16x32xf32>
    %cst_5 = arith.constant 0.000000e+00 : f32
    %6 = vector.broadcast %cst_5 : f32 to vector<16x32xf32>
    %7 = arith.maximumf %5, %6 : vector<16x32xf32>
    %8 = arith.truncf %7 : vector<16x32xf32> to vector<16x32xbf16>
    %c0_6 = arith.constant 0 : index
    %c0_7 = arith.constant 0 : index
    %9 = vector.load %arg4[%c0_6, %c0_7] : memref<32x8xbf16, #tpu.memory_space<vmem>>, vector<32x8xbf16>
    %cst_8 = arith.constant dense<0.000000e+00> : vector<16x8xf32>
    %10 = tpu.matmul %8, %9, %cst_8 {dimension_numbers = #tpu.dot_dimension_numbers<[1], [0], [0], [1], [0, 0, 1, 1], [], []>} : vector<16x32xbf16>, vector<32x8xbf16>, vector<16x8xf32> -> vector<16x8xf32>
    %c0_9 = arith.constant 0 : index
    %c0_10 = arith.constant 0 : index
    %11 = vector.load %arg5[%c0_9, %c0_10] : memref<1x8xf32, #tpu.memory_space<vmem>>, vector<1x8xf32>
    %12 = vector.broadcast %11 : vector<1x8xf32> to vector<16x8xf32>
    %13 = arith.addf %10, %12 : vector<16x8xf32>
    %c0_11 = arith.constant 0 : index
    %c0_12 = arith.constant 0 : index
    %14 = vector.load %arg8[%c0_11, %c0_12] : memref<16x8xf32, #tpu.memory_space<vmem>>, vector<16x8xf32>
    tpu.vector_store %arg8[%c0_11, %c0_12], %13 {strides = array<i32>} : memref<16x8xf32, #tpu.memory_space<vmem>>, vector<16x8xf32>,
    %cst_13 = arith.constant 0.000000e+00 : f32
    %15 = vector.broadcast %cst_13 : f32 to vector<16x8xf32>
    %16 = arith.subf %15, %13 : vector<16x8xf32>
    %17 = math.exp %16 : vector<16x8xf32>
    %cst_14 = arith.constant 1.000000e+00 : f32
    %18 = vector.broadcast %cst_14 : f32 to vector<16x8xf32>
    %19 = arith.addf %18, %17 : vector<16x8xf32>
    %20 = tpu.reciprocal %19 {approx = true} : vector<16x8xf32> -> vector<16x8xf32>
    %21 = arith.truncf %20 : vector<16x8xf32> to vector<16x8xbf16>
    %c0_15 = arith.constant 0 : index
    %c0_16 = arith.constant 0 : index
    %22 = vector.load %arg6[%c0_15, %c0_16] : memref<8x3xbf16, #tpu.memory_space<vmem>>, vector<8x3xbf16>
    %cst_17 = arith.constant dense<0.000000e+00> : vector<16x3xf32>
    %23 = tpu.matmul %21, %22, %cst_17 {dimension_numbers = #tpu.dot_dimension_numbers<[1], [0], [0], [1], [0, 0, 1, 1], [], []>} : vector<16x8xbf16>, vector<8x3xbf16>, vector<16x3xf32> -> vector<16x3xf32>
    %c0_18 = arith.constant 0 : index
    %c0_19 = arith.constant 0 : index
    %24 = vector.load %arg7[%c0_18, %c0_19] : memref<1x3xf32, #tpu.memory_space<vmem>>, vector<1x3xf32>
    %25 = vector.broadcast %24 : vector<1x3xf32> to vector<16x3xf32>
    %26 = arith.addf %23, %25 : vector<16x3xf32>
    %c0_20 = arith.constant 0 : index
    %c0_21 = arith.constant 0 : index
    %27 = vector.load %arg9[%c0_20, %c0_21] : memref<16x3xf32, #tpu.memory_space<vmem>>, vector<16x3xf32>
    tpu.vector_store %arg9[%c0_20, %c0_21], %26 {strides = array<i32>} : memref<16x3xf32, #tpu.memory_space<vmem>>, vector<16x3xf32>,
    return
  }
  func.func @transform_0(%arg0: i32) -> (i32, i32) {
    %c0_i32 = arith.constant 0 : i32
    %c0_i32_0 = arith.constant 0 : i32
    return %arg0, %c0_i32 : i32, i32
  }
  func.func @transform_1(%arg0: i32) -> (i32, i32) {
    %c0_i32 = arith.constant 0 : i32
    %c0_i32_0 = arith.constant 0 : i32
    %c0_i32_1 = arith.constant 0 : i32
    return %c0_i32, %c0_i32_0 : i32, i32
  }
  func.func @transform_2(%arg0: i32) -> (i32, i32) {
    %c0_i32 = arith.constant 0 : i32
    %c0_i32_0 = arith.constant 0 : i32
    %c0_i32_1 = arith.constant 0 : i32
    return %c0_i32, %c0_i32_0 : i32, i32
  }
  func.func @transform_3(%arg0: i32) -> (i32, i32) {
    %c0_i32 = arith.constant 0 : i32
    %c0_i32_0 = arith.constant 0 : i32
    %c0_i32_1 = arith.constant 0 : i32
    return %c0_i32, %c0_i32_0 : i32, i32
  }
  func.func @transform_4(%arg0: i32) -> (i32, i32) {
    %c0_i32 = arith.constant 0 : i32
    %c0_i32_0 = arith.constant 0 : i32
    %c0_i32_1 = arith.constant 0 : i32
    return %c0_i32, %c0_i32_0 : i32, i32
  }
  func.func @transform_5(%arg0: i32) -> (i32, i32) {
    %c0_i32 = arith.constant 0 : i32
    %c0_i32_0 = arith.constant 0 : i32
    %c0_i32_1 = arith.constant 0 : i32
    return %c0_i32, %c0_i32_0 : i32, i32
  }
  func.func @transform_6(%arg0: i32) -> (i32, i32) {
    %c0_i32 = arith.constant 0 : i32
    %c0_i32_0 = arith.constant 0 : i32
    %c0_i32_1 = arith.constant 0 : i32
    return %c0_i32, %c0_i32_0 : i32, i32
  }
  func.func @transform_7(%arg0: i32) -> (i32, i32) {
    %c0_i32 = arith.constant 0 : i32
    %c0_i32_0 = arith.constant 0 : i32
    return %arg0, %c0_i32 : i32, i32
  }
  func.func @transform_8(%arg0: i32) -> (i32, i32) {
    %c0_i32 = arith.constant 0 : i32
    %c0_i32_0 = arith.constant 0 : i32
    return %arg0, %c0_i32 : i32, i32
  }
}

module attributes {stable_mosaic.version = 11 : i64} {
  func.func @_e2e_kernel(%arg0: i32, %arg1: memref<16x32xbf16, #tpu.memory_space<vmem>>, %arg2: memref<32x32xbf16, #tpu.memory_space<vmem>>, %arg3: memref<1x32xf32, #tpu.memory_space<vmem>>, %arg4: memref<32x8xbf16, #tpu.memory_space<vmem>>, %arg5: memref<1x8xf32, #tpu.memory_space<vmem>>, %arg6: memref<8x3xbf16, #tpu.memory_space<vmem>>, %arg7: memref<1x3xf32, #tpu.memory_space<vmem>>, %arg8: memref<16x8xf32, #tpu.memory_space<vmem>>, %arg9: memref<16x3xf32, #tpu.memory_space<vmem>>) attributes {dimension_semantics = [#tpu.dimension_semantics<parallel>], iteration_bounds = array<i64: 1>, scalar_prefetch = 0 : i64, scratch_operands = 0 : i64, tpu.core_type = #tpu.core_type<tc>, window_params = [{transform_indices = @transform_0, window_bounds = array<i64: 16, 32>}, {pipeline_mode = #tpu.pipeline_mode<synchronous>, transform_indices = @transform_1, window_bounds = array<i64: 32, 32>}, {pipeline_mode = #tpu.pipeline_mode<synchronous>, transform_indices = @transform_2, window_bounds = array<i64: 1, 32>}, {pipeline_mode = #tpu.pipeline_mode<synchronous>, transform_indices = @transform_3, window_bounds = array<i64: 32, 8>}, {pipeline_mode = #tpu.pipeline_mode<synchronous>, transform_indices = @transform_4, window_bounds = array<i64: 1, 8>}, {pipeline_mode = #tpu.pipeline_mode<synchronous>, transform_indices = @transform_5, window_bounds = array<i64: 8, 3>}, {pipeline_mode = #tpu.pipeline_mode<synchronous>, transform_indices = @transform_6, window_bounds = array<i64: 1, 3>}, {transform_indices = @transform_7, window_bounds = array<i64: 16, 8>}, {transform_indices = @transform_8, window_bounds = array<i64: 16, 3>}]} {
    %c0 = arith.constant 0 : index
    %c0_0 = arith.constant 0 : index
    %0 = vector.load %arg1[%c0, %c0_0] : memref<16x32xbf16, #tpu.memory_space<vmem>>, vector<16x32xbf16>
    %c0_1 = arith.constant 0 : index
    %c0_2 = arith.constant 0 : index
    %1 = vector.load %arg2[%c0_1, %c0_2] : memref<32x32xbf16, #tpu.memory_space<vmem>>, vector<32x32xbf16>
    %cst = arith.constant dense<0.000000e+00> : vector<16x32xf32>
    %2 = tpu.matmul %0, %1, %cst {dimension_numbers = #tpu.dot_dimension_numbers<[1], [0], [0], [1], [0, 0, 1, 1], [], []>} : vector<16x32xbf16>, vector<32x32xbf16>, vector<16x32xf32> -> vector<16x32xf32>
    %c0_3 = arith.constant 0 : index
    %c0_4 = arith.constant 0 : index
    %3 = vector.load %arg3[%c0_3, %c0_4] : memref<1x32xf32, #tpu.memory_space<vmem>>, vector<1x32xf32>
    %4 = vector.broadcast %3 : vector<1x32xf32> to vector<16x32xf32>
    %5 = arith.addf %2, %4 : vector<16x32xf32>
    %cst_5 = arith.constant 0.000000e+00 : f32
    %6 = vector.broadcast %cst_5 : f32 to vector<16x32xf32>
    %7 = arith.maximumf %5, %6 : vector<16x32xf32>
    %8 = arith.truncf %7 : vector<16x32xf32> to vector<16x32xbf16>
    %c0_6 = arith.constant 0 : index
    %c0_7 = arith.constant 0 : index
    %9 = vector.load %arg4[%c0_6, %c0_7] : memref<32x8xbf16, #tpu.memory_space<vmem>>, vector<32x8xbf16>
    %cst_8 = arith.constant dense<0.000000e+00> : vector<16x8xf32>
    %10 = tpu.matmul %8, %9, %cst_8 {dimension_numbers = #tpu.dot_dimension_numbers<[1], [0], [0], [1], [0, 0, 1, 1], [], []>} : vector<16x32xbf16>, vector<32x8xbf16>, vector<16x8xf32> -> vector<16x8xf32>
    %c0_9 = arith.constant 0 : index
    %c0_10 = arith.constant 0 : index
    %11 = vector.load %arg5[%c0_9, %c0_10] : memref<1x8xf32, #tpu.memory_space<vmem>>, vector<1x8xf32>
    %12 = vector.broadcast %11 : vector<1x8xf32> to vector<16x8xf32>
    %13 = arith.addf %10, %12 : vector<16x8xf32>
    %c0_11 = arith.constant 0 : index
    %c0_12 = arith.constant 0 : index
    %14 = vector.load %arg8[%c0_11, %c0_12] : memref<16x8xf32, #tpu.memory_space<vmem>>, vector<16x8xf32>
    tpu.vector_store %arg8[%c0_11, %c0_12], %13 {strides = array<i32>} : memref<16x8xf32, #tpu.memory_space<vmem>>, vector<16x8xf32>,
    %cst_13 = arith.constant 0.000000e+00 : f32
    %15 = vector.broadcast %cst_13 : f32 to vector<16x8xf32>
    %16 = arith.subf %15, %13 : vector<16x8xf32>
    %17 = math.exp %16 : vector<16x8xf32>
    %cst_14 = arith.constant 1.000000e+00 : f32
    %18 = vector.broadcast %cst_14 : f32 to vector<16x8xf32>
    %19 = arith.addf %18, %17 : vector<16x8xf32>
    %20 = tpu.reciprocal %19 {approx = true} : vector<16x8xf32> -> vector<16x8xf32>
    %21 = arith.truncf %20 : vector<16x8xf32> to vector<16x8xbf16>
    %c0_15 = arith.constant 0 : index
    %c0_16 = arith.constant 0 : index
    %22 = vector.load %arg6[%c0_15, %c0_16] : memref<8x3xbf16, #tpu.memory_space<vmem>>, vector<8x3xbf16>
    %cst_17 = arith.constant dense<0.000000e+00> : vector<16x3xf32>
    %23 = tpu.matmul %21, %22, %cst_17 {dimension_numbers = #tpu.dot_dimension_numbers<[1], [0], [0], [1], [0, 0, 1, 1], [], []>} : vector<16x8xbf16>, vector<8x3xbf16>, vector<16x3xf32> -> vector<16x3xf32>
    %c0_18 = arith.constant 0 : index
    %c0_19 = arith.constant 0 : index
    %24 = vector.load %arg7[%c0_18, %c0_19] : memref<1x3xf32, #tpu.memory_space<vmem>>, vector<1x3xf32>
    %25 = vector.broadcast %24 : vector<1x3xf32> to vector<16x3xf32>
    %26 = arith.addf %23, %25 : vector<16x3xf32>
    %c0_20 = arith.constant 0 : index
    %c0_21 = arith.constant 0 : index
    %27 = vector.load %arg9[%c0_20, %c0_21] : memref<16x3xf32, #tpu.memory_space<vmem>>, vector<16x3xf32>
    tpu.vector_store %arg9[%c0_20, %c0_21], %26 {strides = array<i32>} : memref<16x3xf32, #tpu.memory_space<vmem>>, vector<16x3xf32>,
    return
  }
  func.func @transform_0(%arg0: i32) -> (i32, i32) {
    %c0_i32 = arith.constant 0 : i32
    %c0_i32_0 = arith.constant 0 : i32
    return %arg0, %c0_i32 : i32, i32
  }
  func.func @transform_1(%arg0: i32) -> (i32, i32) {
    %c0_i32 = arith.constant 0 : i32
    %c0_i32_0 = arith.constant 0 : i32
    %c0_i32_1 = arith.constant 0 : i32
    return %c0_i32, %c0_i32_0 : i32, i32
  }
  func.func @transform_2(%arg0: i32) -> (i32, i32) {
    %c0_i32 = arith.constant 0 : i32
    %c0_i32_0 = arith.constant 0 : i32
    %c0_i32_1 = arith.constant 0 : i32
    return %c0_i32, %c0_i32_0 : i32, i32
  }
  func.func @transform_3(%arg0: i32) -> (i32, i32) {
    %c0_i32 = arith.constant 0 : i32
    %c0_i32_0 = arith.constant 0 : i32
    %c0_i32_1 = arith.constant 0 : i32
    return %c0_i32, %c0_i32_0 : i32, i32
  }
  func.func @transform_4(%arg0: i32) -> (i32, i32) {
    %c0_i32 = arith.constant 0 : i32
    %c0_i32_0 = arith.constant 0 : i32
    %c0_i32_1 = arith.constant 0 : i32
    return %c0_i32, %c0_i32_0 : i32, i32
  }
  func.func @transform_5(%arg0: i32) -> (i32, i32) {
    %c0_i32 = arith.constant 0 : i32
    %c0_i32_0 = arith.constant 0 : i32
    %c0_i32_1 = arith.constant 0 : i32
    return %c0_i32, %c0_i32_0 : i32, i32
  }
  func.func @transform_6(%arg0: i32) -> (i32, i32) {
    %c0_i32 = arith.constant 0 : i32
    %c0_i32_0 = arith.constant 0 : i32
    %c0_i32_1 = arith.constant 0 : i32
    return %c0_i32, %c0_i32_0 : i32, i32
  }
  func.func @transform_7(%arg0: i32) -> (i32, i32) {
    %c0_i32 = arith.constant 0 : i32
    %c0_i32_0 = arith.constant 0 : i32
    return %arg0, %c0_i32 : i32, i32
  }
  func.func @transform_8(%arg0: i32) -> (i32, i32) {
    %c0_i32 = arith.constant 0 : i32
    %c0_i32_0 = arith.constant 0 : i32
    return %arg0, %c0_i32 : i32, i32
  }
}

</mosaic_0001>

<llo_original>
// kernel: tpu_custom_call.1
$region0: #{tpu_custom_call.1}
  #allocation0 [shape = 'u32[]', space=smem, size = 0x4, offset = 0x4, fixed_abs, tag = 'smem constant byte address 0x4 - core index']
  #allocation1 [shape = 'u32[72,128]{1,0:T(1,128)}', space=vmem, size = 0x9000, scoped, tag = 'internal scratch']
  %s0 = inlined_call_operand.vmem [shape: bf16[16,32], index: 0, kind: input, shape index: {}]
  %s1 = inlined_call_operand.vmem [shape: bf16[32,32], index: 1, kind: input, shape index: {}]
  %s2 = inlined_call_operand.hbm [shape: f32[1,32], index: 2, kind: input, shape index: {}]
  %s3 = inlined_call_operand.vmem [shape: bf16[32,8], index: 3, kind: input, shape index: {}]
  %s4 = inlined_call_operand.hbm [shape: f32[1,8], index: 4, kind: input, shape index: {}]
  %s5 = inlined_call_operand.vmem [shape: bf16[8,3], index: 5, kind: input, shape index: {}]
  %s6 = inlined_call_operand.vmem [shape: f32[1,3], index: 6, kind: input, shape index: {}]
  %s7 = inlined_call_operand.vmem [shape: f32[16,8], index: 7, kind: output, shape index: {0}]
  %s8 = inlined_call_operand.vmem [shape: f32[16,3], index: 8, kind: output, shape index: {1}]
  %9 = xla_tuple %s7, %s8
  %s10 = sld [smem:[#allocation0]]
  $region54: #{tpu_custom_call.1} parent=0
    _
  %s12 = ssub.s32 1, %s10
  %s13 = scalar_select 0, %s12, %s10
  $region1: #{tpu_custom_call.1} parent=0
    #allocation2 [shape = 'u8[512]{0}', space=vmem, size = 0x400, scoped, tag = 'input window, operand 2, single buffered']
    #allocation3 [shape = 's32[1]{0}', space=sflag, size = 0x4, scoped, tag = 'scoped memory for tpu_custom_call.1']
    #allocation4 [shape = 'u8[512]{0}', space=vmem, size = 0x400, scoped, tag = 'input window, operand 4, single buffered']
    #allocation5 [shape = 's32[1]{0}', space=sflag, size = 0x4, scoped, tag = 'scoped memory for tpu_custom_call.1']
    %14 = vsyncpa [#allocation3], 0
    %15 = vsyncpa [#allocation5], 0
    // Predicated region
    $region2: #{tpu_custom_call.1} parent=1 // pred_check
      _
    $region3: #{tpu_custom_call.1} parent=1 // pred_check_branch
      %17 = sbr.rel (0) target = $region5
    $region4: #{tpu_custom_call.1} parent=1 // pred_region
      _
    $region5: #{tpu_custom_call.1} parent=1 // pred_fallthru
      _
    // Predicated region
    $region6: #{tpu_custom_call.1} parent=1 // pred_check
      _
    $region7: #{tpu_custom_call.1} parent=1 // pred_check_branch
      %19 = sbr.rel (0) target = $region9
    $region8: #{tpu_custom_call.1} parent=1 // pred_region
      _
    $region9: #{tpu_custom_call.1} parent=1 // pred_fallthru
      _
    // Predicated region
    $region10: #{tpu_custom_call.1} parent=1 // pred_check
      _
    $region11: #{tpu_custom_call.1} parent=1 // pred_check_branch
      %21 = sbr.rel (0) target = $region13
    $region12: #{tpu_custom_call.1} parent=1 // pred_region
      %23 = vsyncadd [#allocation3], 0
      %s25 = sshll.u32 %s2, 4
      %s26 = int_to_ptr.hbm [resolvable:$true] %s25
      %s27 = sshll.u32 [#allocation2], 4
      %s28 = int_to_ptr.vmem [resolvable:$true] %s27
      %30 = dma.hbm_to_vmem [thread:$0]  %s26, 16, %s28, [#allocation3]
    $region13: #{tpu_custom_call.1} parent=1 // pred_fallthru
      _
    // Predicated region
    $region14: #{tpu_custom_call.1} parent=1 // pred_check
      _
    $region15: #{tpu_custom_call.1} parent=1 // pred_check_branch
      %32 = sbr.rel (0) target = $region17
    $region16: #{tpu_custom_call.1} parent=1 // pred_region
      _
    $region17: #{tpu_custom_call.1} parent=1 // pred_fallthru
      _
    // Predicated region
    $region18: #{tpu_custom_call.1} parent=1 // pred_check
      _
    $region19: #{tpu_custom_call.1} parent=1 // pred_check_branch
      %34 = sbr.rel (0) target = $region21
    $region20: #{tpu_custom_call.1} parent=1 // pred_region
      %36 = vsyncadd [#allocation5], 0
      %s38 = sshll.u32 %s4, 4
      %s39 = int_to_ptr.hbm [resolvable:$true] %s38
      %s40 = sshll.u32 [#allocation4], 4
      %s41 = int_to_ptr.vmem [resolvable:$true] %s40
      %43 = dma.hbm_to_vmem [thread:$0]  %s39, 16, %s41, [#allocation5]
    $region21: #{tpu_custom_call.1} parent=1 // pred_fallthru
      _
    // Predicated region
    $region22: #{tpu_custom_call.1} parent=1 // pred_check
      _
    $region23: #{tpu_custom_call.1} parent=1 // pred_check_branch
      %45 = sbr.rel (0) target = $region25
    $region24: #{tpu_custom_call.1} parent=1 // pred_region
      _
    $region25: #{tpu_custom_call.1} parent=1 // pred_fallthru
      _
    // Predicated region
    $region26: #{tpu_custom_call.1} parent=1 // pred_check
      _
    $region27: #{tpu_custom_call.1} parent=1 // pred_check_branch
      %47 = sbr.rel (0) target = $region29
    $region28: #{tpu_custom_call.1} parent=1 // pred_region
      _
    $region29: #{tpu_custom_call.1} parent=1 // pred_fallthru
      _
    // Predicated region
    $region30: #{tpu_custom_call.1} parent=1 // pred_check
      _
    $region31: #{tpu_custom_call.1} parent=1 // pred_check_branch
      %49 = sbr.rel (0) target = $region33
    $region32: #{tpu_custom_call.1} parent=1 // pred_region
      %51 = dma.done [#allocation3], 16
    $region33: #{tpu_custom_call.1} parent=1 // pred_fallthru
      _
    // Predicated region
    $region34: #{tpu_custom_call.1} parent=1 // pred_check
      _
    $region35: #{tpu_custom_call.1} parent=1 // pred_check_branch
      %53 = sbr.rel (0) target = $region37
    $region36: #{tpu_custom_call.1} parent=1 // pred_region
      %55 = dma.done [#allocation5], 16
    $region37: #{tpu_custom_call.1} parent=1 // pred_fallthru
      _
    %v57 = vld [vmem:[%s0] sm:$0xf]
    %v58 = vld [vmem:[%s0 + $0x4] sm:$0xf]
    %v59 = vld [vmem:[%s1] sm:$0xf]
    %v60 = vld [vmem:[%s1 + $0x4] sm:$0xf]
    %v61 = vld [vmem:[%s1 + $0x8] sm:$0xf]
    %v62 = vld [vmem:[%s1 + $0xc] sm:$0xf]
    %v63 = vld [vmem:[#allocation2] sm:$0x1]
    %v65 = vperm.slane %v63, 0
    %v69 = vunpack.c.l.b16 %v57
    %v70 = vunpack.c.l.b16 %v58
    %v71 = vpack.c.b16 %v70, %v69
    %v76 = vunpack.c.l.b16 %v59
    %v77 = vunpack.c.l.b16 %v60
    %v78 = vunpack.c.l.b16 %v61
    %v79 = vunpack.c.l.b16 %v62
    %v80 = vpack.c.b16 %v77, %v76
    %v81 = vpack.c.b16 %v79, %v78
    %vm84 = vcmask 261120
    %v86 = vsel %vm84, %v71, 0
    %88 = vmatpush.bf16.msra.mxu0 0
    %89 = vmatpush.bf16.msra.mxu0 0
    %90 = vmatpush.bf16.msra.mxu0 0
    %91 = vmatpush.bf16.msra.mxu0 0
    %92 = vmatpush.bf16.msra.mxu0 0
    %93 = vmatpush.bf16.msra.mxu0 0
    %94 = vmatpush.bf16.msra.mxu0 %v81
    %95 = vmatpush.bf16.msra.mxu0 %v80
    %96 = vmatmul.bf16.gmra.mxu0 %v86
    %v97 = vpop.f32.mrf.mxu0
    %v98 = vadd.f32 %v65, %v97
    %v99 = vpop.f32.mrf.mxu0
    %v100 = vadd.f32 %v65, %v99
    %101 = vdwg.mxu0
    %v102 = vmax.f32 %v98, 0.0
    %v103 = vmax.f32 %v100, 0.0
    %v104 = vpack.c.bf16 %v103, %v102
    %v105 = vld [vmem:[%s3] sm:$0xf]
    %v106 = vld [vmem:[%s3 + $0x4] sm:$0xf]
    %v107 = vld [vmem:[%s3 + $0x8] sm:$0xf]
    %v108 = vld [vmem:[%s3 + $0xc] sm:$0xf]
    %v109 = vld [vmem:[#allocation4] sm:$0x1]
    %v111 = vperm.slane %v109, 0
    %v117 = vunpack.c.l.b16 %v105
    %v118 = vunpack.c.l.b16 %v106
    %v119 = vunpack.c.l.b16 %v107
    %v120 = vunpack.c.l.b16 %v108
    %v121 = vpack.c.b16 %v118, %v117
    %v122 = vpack.c.b16 %v120, %v119
    %v126 = vsel %vm84, %v104, 0
    %128 = vmatpush.bf16.msra.mxu0 0
    %129 = vmatpush.bf16.msra.mxu0 0
    %130 = vmatpush.bf16.msra.mxu0 0
    %131 = vmatpush.bf16.msra.mxu0 0
    %132 = vmatpush.bf16.msra.mxu0 0
    %133 = vmatpush.bf16.msra.mxu0 0
    %134 = vmatpush.bf16.msra.mxu0 %v122
    %135 = vmatpush.bf16.msra.mxu0 %v121
    %136 = vmatmul.bf16.gmra.mxu0 %v126
    %v137 = vpop.f32.mrf.mxu0
    %v138 = vadd.f32 %v111, %v137
    %v139 = vpop.f32.mrf.mxu0
    %v140 = vadd.f32 %v111, %v139
    %141 = vdwg.mxu0
    %vm142 = vcmask 64512
    %143 = vst.msk [vmem:[%s7] sm:$0xff] %vm142, %v138
    %144 = vst.msk [vmem:[%s7 + $0x8] sm:$0xff] %vm142, %v140
    %v145 = vsub.f32 0.0, %v138
    %v146 = vsub.f32 0.0, %v140
    %v147 = vmul.f32 %v145, 1.442695
    %v148 = vpow.pop %v147
    %v149 = vmul.f32 %v146, 1.442695
    %v150 = vpow.pop %v149
    %v151 = vadd.f32 %v148, 1.0
    %v152 = vadd.f32 %v150, 1.0
    %v153 = vrcp.pop %v151
    %v154 = vrcp.pop %v152
    %v155 = vpack.c.bf16 %v154, %v153
    %v156 = vld [vmem:[%s5] sm:$0xf]
    %v157 = vld [vmem:[%s6] sm:$0x1]
    %v159 = vperm.slane %v157, 0
    %v162 = vsel %vm142, %v155, 0
    %vm164 = vcmask 1043456
    %v166 = vsel %vm164, %v156, 0
    %168 = vmatpush.bf16.msra.mxu0 0
    %169 = vmatpush.bf16.msra.mxu0 0
    %170 = vmatpush.bf16.msra.mxu0 0
    %171 = vmatpush.bf16.msra.mxu0 0
    %172 = vmatpush.bf16.msra.mxu0 0
    %173 = vmatpush.bf16.msra.mxu0 0
    %174 = vmatpush.bf16.msra.mxu0 0
    %175 = vmatpush.bf16.msra.mxu0 %v166
    %176 = vmatmul.bf16.gmra.mxu0 %v162
    %v177 = vpop.f32.mrf.mxu0
    %v178 = vadd.f32 %v159, %v177
    %v179 = vpop.f32.mrf.mxu0
    %v180 = vadd.f32 %v159, %v179
    %181 = vdwg.mxu0
    %vm182 = vcmask 23552
    %183 = vst.msk [vmem:[%s8] sm:$0xff] %vm182, %v178
    %184 = vst.msk [vmem:[%s8 + $0x8] sm:$0xff] %vm182, %v180
    // Predicated region
    $region38: #{tpu_custom_call.1} parent=1 // pred_check
      _
    $region39: #{tpu_custom_call.1} parent=1 // pred_check_branch
      %186 = sbr.rel (0) target = $region41
    $region40: #{tpu_custom_call.1} parent=1 // pred_region
      _
    $region41: #{tpu_custom_call.1} parent=1 // pred_fallthru
      _
    // Predicated region
    $region42: #{tpu_custom_call.1} parent=1 // pred_check
      _
    $region43: #{tpu_custom_call.1} parent=1 // pred_check_branch
      %188 = sbr.rel (0) target = $region45
    $region44: #{tpu_custom_call.1} parent=1 // pred_region
      _
    $region45: #{tpu_custom_call.1} parent=1 // pred_fallthru
      _
    // Predicated region
    $region46: #{tpu_custom_call.1} parent=1 // pred_check
      _
    $region47: #{tpu_custom_call.1} parent=1 // pred_check_branch
      %190 = sbr.rel (0) target = $region49
    $region48: #{tpu_custom_call.1} parent=1 // pred_region
      _
    $region49: #{tpu_custom_call.1} parent=1 // pred_fallthru
      _
    // Predicated region
    $region50: #{tpu_custom_call.1} parent=1 // pred_check
      _
    $region51: #{tpu_custom_call.1} parent=1 // pred_check_branch
      %192 = sbr.rel (0) target = $region53
    $region52: #{tpu_custom_call.1} parent=1 // pred_region
      _
    $region53: #{tpu_custom_call.1} parent=1 // pred_fallthru
      _
    %193 = vsyncpa [#allocation3], 1
    %194 = vsyncpa [#allocation5], 1

// kernel: tpu_custom_call.1
$region0: #{tpu_custom_call.1}
  #allocation0 [shape = 'u32[]', space=smem, size = 0x4, offset = 0x4, fixed_abs, tag = 'smem constant byte address 0x4 - core index']
  #allocation1 [shape = 'u32[72,128]{1,0:T(1,128)}', space=vmem, size = 0x9000, scoped, tag = 'internal scratch']
  %s0 = inlined_call_operand.vmem [shape: bf16[16,32], index: 0, kind: input, shape index: {}]
  %s1 = inlined_call_operand.vmem [shape: bf16[32,32], index: 1, kind: input, shape index: {}]
  %s2 = inlined_call_operand.hbm [shape: f32[1,32], index: 2, kind: input, shape index: {}]
  %s3 = inlined_call_operand.vmem [shape: bf16[32,8], index: 3, kind: input, shape index: {}]
  %s4 = inlined_call_operand.hbm [shape: f32[1,8], index: 4, kind: input, shape index: {}]
  %s5 = inlined_call_operand.vmem [shape: bf16[8,3], index: 5, kind: input, shape index: {}]
  %s6 = inlined_call_operand.vmem [shape: f32[1,3], index: 6, kind: input, shape index: {}]
  %s7 = inlined_call_operand.vmem [shape: f32[16,8], index: 7, kind: output, shape index: {0}]
  %s8 = inlined_call_operand.vmem [shape: f32[16,3], index: 8, kind: output, shape index: {1}]
  %9 = xla_tuple %s7, %s8
  %s10 = sld [smem:[#allocation0]]
  $region54: #{tpu_custom_call.1} parent=0
    _
  %s12 = ssub.s32 1, %s10
  %s13 = scalar_select 0, %s12, %s10
  $region1: #{tpu_custom_call.1} parent=0
    #allocation2 [shape = 'u8[512]{0}', space=vmem, size = 0x400, scoped, tag = 'input window, operand 2, single buffered']
    #allocation3 [shape = 's32[1]{0}', space=sflag, size = 0x4, scoped, tag = 'scoped memory for tpu_custom_call.1']
    #allocation4 [shape = 'u8[512]{0}', space=vmem, size = 0x400, scoped, tag = 'input window, operand 4, single buffered']
    #allocation5 [shape = 's32[1]{0}', space=sflag, size = 0x4, scoped, tag = 'scoped memory for tpu_custom_call.1']
    %14 = vsyncpa [#allocation3], 0
    %15 = vsyncpa [#allocation5], 0
    // Predicated region
    $region2: #{tpu_custom_call.1} parent=1 // pred_check
      _
    $region3: #{tpu_custom_call.1} parent=1 // pred_check_branch
      %17 = sbr.rel (0) target = $region5
    $region4: #{tpu_custom_call.1} parent=1 // pred_region
      _
    $region5: #{tpu_custom_call.1} parent=1 // pred_fallthru
      _
    // Predicated region
    $region6: #{tpu_custom_call.1} parent=1 // pred_check
      _
    $region7: #{tpu_custom_call.1} parent=1 // pred_check_branch
      %19 = sbr.rel (0) target = $region9
    $region8: #{tpu_custom_call.1} parent=1 // pred_region
      _
    $region9: #{tpu_custom_call.1} parent=1 // pred_fallthru
      _
    // Predicated region
    $region10: #{tpu_custom_call.1} parent=1 // pred_check
      _
    $region11: #{tpu_custom_call.1} parent=1 // pred_check_branch
      %21 = sbr.rel (0) target = $region13
    $region12: #{tpu_custom_call.1} parent=1 // pred_region
      %23 = vsyncadd [#allocation3], 0
      %s25 = sshll.u32 %s2, 4
      %s26 = int_to_ptr.hbm [resolvable:$true] %s25
      %s27 = sshll.u32 [#allocation2], 4
      %s28 = int_to_ptr.vmem [resolvable:$true] %s27
      %30 = dma.hbm_to_vmem [thread:$0]  %s26, 16, %s28, [#allocation3]
    $region13: #{tpu_custom_call.1} parent=1 // pred_fallthru
      _
    // Predicated region
    $region14: #{tpu_custom_call.1} parent=1 // pred_check
      _
    $region15: #{tpu_custom_call.1} parent=1 // pred_check_branch
      %32 = sbr.rel (0) target = $region17
    $region16: #{tpu_custom_call.1} parent=1 // pred_region
      _
    $region17: #{tpu_custom_call.1} parent=1 // pred_fallthru
      _
    // Predicated region
    $region18: #{tpu_custom_call.1} parent=1 // pred_check
      _
    $region19: #{tpu_custom_call.1} parent=1 // pred_check_branch
      %34 = sbr.rel (0) target = $region21
    $region20: #{tpu_custom_call.1} parent=1 // pred_region
      %36 = vsyncadd [#allocation5], 0
      %s38 = sshll.u32 %s4, 4
      %s39 = int_to_ptr.hbm [resolvable:$true] %s38
      %s40 = sshll.u32 [#allocation4], 4
      %s41 = int_to_ptr.vmem [resolvable:$true] %s40
      %43 = dma.hbm_to_vmem [thread:$0]  %s39, 16, %s41, [#allocation5]
    $region21: #{tpu_custom_call.1} parent=1 // pred_fallthru
      _
    // Predicated region
    $region22: #{tpu_custom_call.1} parent=1 // pred_check
      _
    $region23: #{tpu_custom_call.1} parent=1 // pred_check_branch
      %45 = sbr.rel (0) target = $region25
    $region24: #{tpu_custom_call.1} parent=1 // pred_region
      _
    $region25: #{tpu_custom_call.1} parent=1 // pred_fallthru
      _
    // Predicated region
    $region26: #{tpu_custom_call.1} parent=1 // pred_check
      _
    $region27: #{tpu_custom_call.1} parent=1 // pred_check_branch
      %47 = sbr.rel (0) target = $region29
    $region28: #{tpu_custom_call.1} parent=1 // pred_region
      _
    $region29: #{tpu_custom_call.1} parent=1 // pred_fallthru
      _
    // Predicated region
    $region30: #{tpu_custom_call.1} parent=1 // pred_check
      _
    $region31: #{tpu_custom_call.1} parent=1 // pred_check_branch
      %49 = sbr.rel (0) target = $region33
    $region32: #{tpu_custom_call.1} parent=1 // pred_region
      %51 = dma.done [#allocation3], 16
    $region33: #{tpu_custom_call.1} parent=1 // pred_fallthru
      _
    // Predicated region
    $region34: #{tpu_custom_call.1} parent=1 // pred_check
      _
    $region35: #{tpu_custom_call.1} parent=1 // pred_check_branch
      %53 = sbr.rel (0) target = $region37
    $region36: #{tpu_custom_call.1} parent=1 // pred_region
      %55 = dma.done [#allocation5], 16
    $region37: #{tpu_custom_call.1} parent=1 // pred_fallthru
      _
    %v57 = vld [vmem:[%s0] sm:$0xf]
    %v58 = vld [vmem:[%s0 + $0x4] sm:$0xf]
    %v59 = vld [vmem:[%s1] sm:$0xf]
    %v60 = vld [vmem:[%s1 + $0x4] sm:$0xf]
    %v61 = vld [vmem:[%s1 + $0x8] sm:$0xf]
    %v62 = vld [vmem:[%s1 + $0xc] sm:$0xf]
    %v63 = vld [vmem:[#allocation2] sm:$0x1]
    %v65 = vperm.slane %v63, 0
    %v69 = vunpack.c.l.b16 %v57
    %v70 = vunpack.c.l.b16 %v58
    %v71 = vpack.c.b16 %v70, %v69
    %v76 = vunpack.c.l.b16 %v59
    %v77 = vunpack.c.l.b16 %v60
    %v78 = vunpack.c.l.b16 %v61
    %v79 = vunpack.c.l.b16 %v62
    %v80 = vpack.c.b16 %v77, %v76
    %v81 = vpack.c.b16 %v79, %v78
    %vm84 = vcmask 261120
    %v86 = vsel %vm84, %v71, 0
    %88 = vmatpush.bf16.msra.mxu0 0
    %89 = vmatpush.bf16.msra.mxu0 0
    %90 = vmatpush.bf16.msra.mxu0 0
    %91 = vmatpush.bf16.msra.mxu0 0
    %92 = vmatpush.bf16.msra.mxu0 0
    %93 = vmatpush.bf16.msra.mxu0 0
    %94 = vmatpush.bf16.msra.mxu0 %v81
    %95 = vmatpush.bf16.msra.mxu0 %v80
    %96 = vmatmul.bf16.gmra.mxu0 %v86
    %v97 = vpop.f32.mrf.mxu0
    %v98 = vadd.f32 %v65, %v97
    %v99 = vpop.f32.mrf.mxu0
    %v100 = vadd.f32 %v65, %v99
    %101 = vdwg.mxu0
    %v102 = vmax.f32 %v98, 0.0
    %v103 = vmax.f32 %v100, 0.0
    %v104 = vpack.c.bf16 %v103, %v102
    %v105 = vld [vmem:[%s3] sm:$0xf]
    %v106 = vld [vmem:[%s3 + $0x4] sm:$0xf]
    %v107 = vld [vmem:[%s3 + $0x8] sm:$0xf]
    %v108 = vld [vmem:[%s3 + $0xc] sm:$0xf]
    %v109 = vld [vmem:[#allocation4] sm:$0x1]
    %v111 = vperm.slane %v109, 0
    %v117 = vunpack.c.l.b16 %v105
    %v118 = vunpack.c.l.b16 %v106
    %v119 = vunpack.c.l.b16 %v107
    %v120 = vunpack.c.l.b16 %v108
    %v121 = vpack.c.b16 %v118, %v117
    %v122 = vpack.c.b16 %v120, %v119
    %v126 = vsel %vm84, %v104, 0
    %128 = vmatpush.bf16.msra.mxu0 0
    %129 = vmatpush.bf16.msra.mxu0 0
    %130 = vmatpush.bf16.msra.mxu0 0
    %131 = vmatpush.bf16.msra.mxu0 0
    %132 = vmatpush.bf16.msra.mxu0 0
    %133 = vmatpush.bf16.msra.mxu0 0
    %134 = vmatpush.bf16.msra.mxu0 %v122
    %135 = vmatpush.bf16.msra.mxu0 %v121
    %136 = vmatmul.bf16.gmra.mxu0 %v126
    %v137 = vpop.f32.mrf.mxu0
    %v138 = vadd.f32 %v111, %v137
    %v139 = vpop.f32.mrf.mxu0
    %v140 = vadd.f32 %v111, %v139
    %141 = vdwg.mxu0
    %vm142 = vcmask 64512
    %143 = vst.msk [vmem:[%s7] sm:$0xff] %vm142, %v138
    %144 = vst.msk [vmem:[%s7 + $0x8] sm:$0xff] %vm142, %v140
    %v145 = vsub.f32 0.0, %v138
    %v146 = vsub.f32 0.0, %v140
    %v147 = vmul.f32 %v145, 1.442695
    %v148 = vpow.pop %v147
    %v149 = vmul.f32 %v146, 1.442695
    %v150 = vpow.pop %v149
    %v151 = vadd.f32 %v148, 1.0
    %v152 = vadd.f32 %v150, 1.0
    %v153 = vrcp.pop %v151
    %v154 = vrcp.pop %v152
    %v155 = vpack.c.bf16 %v154, %v153
    %v156 = vld [vmem:[%s5] sm:$0xf]
    %v157 = vld [vmem:[%s6] sm:$0x1]
    %v159 = vperm.slane %v157, 0
    %v162 = vsel %vm142, %v155, 0
    %vm164 = vcmask 1043456
    %v166 = vsel %vm164, %v156, 0
    %168 = vmatpush.bf16.msra.mxu0 0
    %169 = vmatpush.bf16.msra.mxu0 0
    %170 = vmatpush.bf16.msra.mxu0 0
    %171 = vmatpush.bf16.msra.mxu0 0
    %172 = vmatpush.bf16.msra.mxu0 0
    %173 = vmatpush.bf16.msra.mxu0 0
    %174 = vmatpush.bf16.msra.mxu0 0
    %175 = vmatpush.bf16.msra.mxu0 %v166
    %176 = vmatmul.bf16.gmra.mxu0 %v162
    %v177 = vpop.f32.mrf.mxu0
    %v178 = vadd.f32 %v159, %v177
    %v179 = vpop.f32.mrf.mxu0
    %v180 = vadd.f32 %v159, %v179
    %181 = vdwg.mxu0
    %vm182 = vcmask 23552
    %183 = vst.msk [vmem:[%s8] sm:$0xff] %vm182, %v178
    %184 = vst.msk [vmem:[%s8 + $0x8] sm:$0xff] %vm182, %v180
    // Predicated region
    $region38: #{tpu_custom_call.1} parent=1 // pred_check
      _
    $region39: #{tpu_custom_call.1} parent=1 // pred_check_branch
      %186 = sbr.rel (0) target = $region41
    $region40: #{tpu_custom_call.1} parent=1 // pred_region
      _
    $region41: #{tpu_custom_call.1} parent=1 // pred_fallthru
      _
    // Predicated region
    $region42: #{tpu_custom_call.1} parent=1 // pred_check
      _
    $region43: #{tpu_custom_call.1} parent=1 // pred_check_branch
      %188 = sbr.rel (0) target = $region45
    $region44: #{tpu_custom_call.1} parent=1 // pred_region
      _
    $region45: #{tpu_custom_call.1} parent=1 // pred_fallthru
      _
    // Predicated region
    $region46: #{tpu_custom_call.1} parent=1 // pred_check
      _
    $region47: #{tpu_custom_call.1} parent=1 // pred_check_branch
      %190 = sbr.rel (0) target = $region49
    $region48: #{tpu_custom_call.1} parent=1 // pred_region
      _
    $region49: #{tpu_custom_call.1} parent=1 // pred_fallthru
      _
    // Predicated region
    $region50: #{tpu_custom_call.1} parent=1 // pred_check
      _
    $region51: #{tpu_custom_call.1} parent=1 // pred_check_branch
      %192 = sbr.rel (0) target = $region53
    $region52: #{tpu_custom_call.1} parent=1 // pred_region
      _
    $region53: #{tpu_custom_call.1} parent=1 // pred_fallthru
      _
    %193 = vsyncpa [#allocation3], 1
    %194 = vsyncpa [#allocation5], 1

</llo_original>
